<compile_context>
chip_gen: v7x
topology: tpu7x:2x2x1
jax: 0.10.0
libtpu: 0.0.40
codegen_flags: <defaults>
</compile_context>

<pallas_src>
import functools

import numpy as np

import jax
import jax.numpy as jnp
from jax import lax
from jax.experimental import pallas as pl
from jax.experimental.pallas import tpu as pltpu

EPS = 1e-5


def _round_up8(c):
    return (c + 7) // 8 * 8


def _halo_masks(H, W):
    """(9, H*W) f32 masks; mask[t] is 1 where tap t=(kh*3+kw) of a 3x3 'same' conv reads
    inside the image (0 where it would read the zero padding)."""
    m = np.zeros((9, H, W), np.float32)
    t = 0
    for dh in (-1, 0, 1):
        for dw in (-1, 0, 1):
            m[t, max(0, -dh):H - max(0, dh), max(0, -dw):W - max(0, dw)] = 1.0
            t += 1
    return jnp.asarray(m.reshape(9, H * W))


def _pad_axis(a, axis, target):
    pad = target - a.shape[axis]
    if pad == 0:
        return a
    widths = [(0, 0)] * a.ndim
    widths[axis] = (0, pad)
    return jnp.pad(a, widths)


def _netconvert2_kernel(mask_ref, x_ref, w1_ref, s1_ref, b1_ref,
                        w2_ref, s2_ref, b2_ref, w3_ref, b3_ref,
                        o_ref, *, H, W):
    """Fused DoubleConv + OutConv for one batch element (channels-on-sublanes layout).

    mask_ref: (9, H*W)           halo masks for the 9 conv taps
    x_ref  : (1, Cin_p, H*W)     input, channels zero-padded to a multiple of 8
    w1_ref : (Cmid_p, 9*Cin_p)   im2col weight of first 3x3 conv (bias=False)
    w2_ref : (Cmid_p, 9*Cmid_p)  im2col weight of second 3x3 conv (bias=False)
    s*/b*  : (Cmid_p, 1)         folded BatchNorm scale / bias
    w3_ref : (Cout, Cmid_p)      1x1 OutConv weight, b3_ref: (Cout, 1) bias
    o_ref  : (1, Cout, H*W)      lane-dense output
    """
    masks = mask_ref[...]                                    # (9, H*W)

    def tap_stack(a):
        # im2col: (C, H*W) -> (9*C, H*W); tap order kh-major / kw-minor, matching the
        # OIHW -> (O, kh, kw, I) -> (O, 9*I) weight reshape done in the wrapper.
        # Wrapped lanes from the roll always land on masked (out-of-image) positions.
        taps = []
        t = 0
        for dh in (-1, 0, 1):
            for dw in (-1, 0, 1):
                s = dh * W + dw
                shifted = a if s == 0 else jnp.roll(a, -s, axis=1)
                if dh == 0 and dw == 0:
                    taps.append(shifted)                     # center tap: mask is all-ones
                else:
                    taps.append(shifted * masks[t:t + 1, :])
                t += 1
        return jnp.concatenate(taps, axis=0)                 # sublane-aligned (C % 8 == 0)

    x = x_ref[0]                                             # (Cin_p, H*W)

    # ---- DoubleConv stage 1: 3x3 conv (no bias) + folded BN + ReLU — one MXU matmul ----
    z1 = jnp.dot(w1_ref[...], tap_stack(x), preferred_element_type=jnp.float32)
    y1 = jnp.maximum(z1 * s1_ref[...] + b1_ref[...], 0.0)    # (Cmid_p, H*W), stays in vregs

    # ---- DoubleConv stage 2: 3x3 conv + folded BN + ReLU — one MXU matmul ----
    z2 = jnp.dot(w2_ref[...], tap_stack(y1), preferred_element_type=jnp.float32)
    y2 = jnp.maximum(z2 * s2_ref[...] + b2_ref[...], 0.0)    # (Cmid_p, H*W)

    # ---- OutConv: 1x1 conv + bias — lane-dense (Cout, H*W) store ----
    out = jnp.dot(w3_ref[...], y2, preferred_element_type=jnp.float32) + b3_ref[...]
    o_ref[0, :, :] = out.astype(o_ref.dtype)


def netconvert2_forward(x_nchw, params):
    """PyTorch-equivalent forward: x -> DoubleConv -> OutConv, NCHW in / NCHW out."""
    N, c_in, H, W = x_nchw.shape
    c_mid = params["w1"].shape[0]
    c_out = params["w3"].shape[0]
    HW = H * W
    c_in_p, c_mid_p = _round_up8(c_in), _round_up8(c_mid)

    # glue: NCHW -> (N, C, H*W) (no transpose), pad channels to a multiple of 8
    x = _pad_axis(x_nchw.reshape(N, c_in, HW).astype(jnp.float32), 1, c_in_p)

    def fold_bn(gamma, beta, mean, var):
        scale = gamma / jnp.sqrt(var + EPS)
        shift = beta - mean * scale
        return (_pad_axis(scale.reshape(-1, 1).astype(jnp.float32), 0, c_mid_p),
                _pad_axis(shift.reshape(-1, 1).astype(jnp.float32), 0, c_mid_p))

    def conv3x3_to_im2col(w, ci_p):                          # OIHW -> (Cmid_p, 9*Ci_p)
        w = _pad_axis(_pad_axis(w.astype(jnp.float32), 0, c_mid_p), 1, ci_p)
        return jnp.transpose(w, (0, 2, 3, 1)).reshape(c_mid_p, 9 * ci_p)

    w1 = conv3x3_to_im2col(params["w1"], c_in_p)
    w2 = conv3x3_to_im2col(params["w2"], c_mid_p)
    w3 = _pad_axis(params["w3"][:, :, 0, 0].astype(jnp.float32), 1, c_mid_p)  # (Cout, Cmid_p)
    s1, b1 = fold_bn(params["g1"], params["be1"], params["m1"], params["v1"])
    s2, b2 = fold_bn(params["g2"], params["be2"], params["m2"], params["v2"])
    b3 = params["b3"].reshape(-1, 1).astype(jnp.float32)
    masks = _halo_masks(H, W)

    out_flat = pl.pallas_call(
        functools.partial(_netconvert2_kernel, H=H, W=W),
        out_shape=jax.ShapeDtypeStruct((N, c_out, HW), jnp.float32),
        grid_spec=pltpu.PrefetchScalarGridSpec(
            num_scalar_prefetch=0,
            grid=(N,),
            in_specs=[
                pl.BlockSpec((9, HW), lambda n: (0, 0)),
                pl.BlockSpec((1, c_in_p, HW), lambda n: (n, 0, 0)),
                pl.BlockSpec((c_mid_p, 9 * c_in_p), lambda n: (0, 0)),
                pl.BlockSpec((c_mid_p, 1), lambda n: (0, 0)),
                pl.BlockSpec((c_mid_p, 1), lambda n: (0, 0)),
                pl.BlockSpec((c_mid_p, 9 * c_mid_p), lambda n: (0, 0)),
                pl.BlockSpec((c_mid_p, 1), lambda n: (0, 0)),
                pl.BlockSpec((c_mid_p, 1), lambda n: (0, 0)),
                pl.BlockSpec((c_out, c_mid_p), lambda n: (0, 0)),
                pl.BlockSpec((c_out, 1), lambda n: (0, 0)),
            ],
            out_specs=pl.BlockSpec((1, c_out, HW), lambda n: (n, 0, 0)),
        ),
        compiler_params=pltpu.CompilerParams(dimension_semantics=("parallel",)),
    )(masks, x, w1, s1, b1, w2, s2, b2, w3, b3)

    return out_flat.reshape(N, c_out, H, W)                  # (N, Cout, H*W) -> NCHW


def make_params(key, c_in, c_mid, c_out):
    ks = jax.random.split(key, 14)
    p = {
        # DoubleConv: conv3x3(bias=False) -> BN -> ReLU -> conv3x3(bias=False) -> BN -> ReLU
        "w1": 0.2 * jax.random.normal(ks[0], (c_mid, c_in, 3, 3), jnp.float32),
        "g1": 1.0 + 0.1 * jax.random.normal(ks[1], (c_mid,), jnp.float32),
        "be1": 0.1 * jax.random.normal(ks[2], (c_mid,), jnp.float32),
        "m1": 0.1 * jax.random.normal(ks[3], (c_mid,), jnp.float32),
        "v1": 1.0 + 0.5 * jax.random.uniform(ks[4], (c_mid,), jnp.float32),
        "w2": 0.2 * jax.random.normal(ks[5], (c_mid, c_mid, 3, 3), jnp.float32),
        "g2": 1.0 + 0.1 * jax.random.normal(ks[6], (c_mid,), jnp.float32),
        "be2": 0.1 * jax.random.normal(ks[7], (c_mid,), jnp.float32),
        "m2": 0.1 * jax.random.normal(ks[8], (c_mid,), jnp.float32),
        "v2": 1.0 + 0.5 * jax.random.uniform(ks[9], (c_mid,), jnp.float32),
        # OutConv: conv1x1 with bias
        "w3": 0.2 * jax.random.normal(ks[10], (c_out, c_mid, 1, 1), jnp.float32),
        "b3": 0.1 * jax.random.normal(ks[11], (c_out,), jnp.float32),
    }
    return p


def reference_forward(x, p):
    """Pure-JAX NCHW reference matching the PyTorch module (eval-mode BN)."""
    dn = ("NCHW", "OIHW", "NCHW")

    def bn(y, g, b, m, v):
        s = g / jnp.sqrt(v + EPS)
        return y * s[None, :, None, None] + (b - m * s)[None, :, None, None]

    y = lax.conv_general_dilated(x, p["w1"], (1, 1), ((1, 1), (1, 1)), dimension_numbers=dn)
    y = jnp.maximum(bn(y, p["g1"], p["be1"], p["m1"], p["v1"]), 0.0)
    y = lax.conv_general_dilated(y, p["w2"], (1, 1), ((1, 1), (1, 1)), dimension_numbers=dn)
    y = jnp.maximum(bn(y, p["g2"], p["be2"], p["m2"], p["v2"]), 0.0)
    y = lax.conv_general_dilated(y, p["w3"], (1, 1), ((0, 0), (0, 0)), dimension_numbers=dn)
    return y + p["b3"][None, :, None, None]


if __name__ == "__main__":
    N, C_IN, H, W = 2, 4, 16, 16       # skip-connection feature map entering up4's conv
    C_MID, C_OUT = 8, 3                # DoubleConv width, n_classes for OutConv

    key = jax.random.PRNGKey(0)
    k_x, k_p = jax.random.split(key)
    x = jax.random.normal(k_x, (N, C_IN, H, W), jnp.float32)
    params = make_params(k_p, C_IN, C_MID, C_OUT)

    out = jax.block_until_ready(netconvert2_forward(x, params))
    ref = jax.block_until_ready(reference_forward(x, params))

    assert out.shape == (N, C_OUT, H, W)
    assert jnp.allclose(out, ref, atol=2e-4, rtol=2e-4), float(jnp.max(jnp.abs(out - ref)))
    print("KERNEL_OK")
</pallas_src>

<mosaic_0001>
module attributes {stable_mosaic.version = 11 : i64} {
  func.func @_netconvert2_kernel(%arg0: i32, %arg1: memref<9x256xf32, #tpu.memory_space<vmem>>, %arg2: memref<1x8x256xf32, #tpu.memory_space<vmem>>, %arg3: memref<8x72xf32, #tpu.memory_space<vmem>>, %arg4: memref<8x1xf32, #tpu.memory_space<vmem>>, %arg5: memref<8x1xf32, #tpu.memory_space<vmem>>, %arg6: memref<8x72xf32, #tpu.memory_space<vmem>>, %arg7: memref<8x1xf32, #tpu.memory_space<vmem>>, %arg8: memref<8x1xf32, #tpu.memory_space<vmem>>, %arg9: memref<3x8xf32, #tpu.memory_space<vmem>>, %arg10: memref<3x1xf32, #tpu.memory_space<vmem>>, %arg11: memref<1x3x256xf32, #tpu.memory_space<vmem>>) attributes {dimension_semantics = [#tpu.dimension_semantics<parallel>], iteration_bounds = array<i64: 2>, scalar_prefetch = 0 : i64, scratch_operands = 0 : i64, tpu.core_type = #tpu.core_type<tc>, window_params = [{pipeline_mode = #tpu.pipeline_mode<synchronous>, transform_indices = @transform_0, window_bounds = array<i64: 9, 256>}, {transform_indices = @transform_1, window_bounds = array<i64: 1, 8, 256>}, {pipeline_mode = #tpu.pipeline_mode<synchronous>, transform_indices = @transform_2, window_bounds = array<i64: 8, 72>}, {pipeline_mode = #tpu.pipeline_mode<synchronous>, transform_indices = @transform_3, window_bounds = array<i64: 8, 1>}, {pipeline_mode = #tpu.pipeline_mode<synchronous>, transform_indices = @transform_4, window_bounds = array<i64: 8, 1>}, {pipeline_mode = #tpu.pipeline_mode<synchronous>, transform_indices = @transform_5, window_bounds = array<i64: 8, 72>}, {pipeline_mode = #tpu.pipeline_mode<synchronous>, transform_indices = @transform_6, window_bounds = array<i64: 8, 1>}, {pipeline_mode = #tpu.pipeline_mode<synchronous>, transform_indices = @transform_7, window_bounds = array<i64: 8, 1>}, {pipeline_mode = #tpu.pipeline_mode<synchronous>, transform_indices = @transform_8, window_bounds = array<i64: 3, 8>}, {pipeline_mode = #tpu.pipeline_mode<synchronous>, transform_indices = @transform_9, window_bounds = array<i64: 3, 1>}, {transform_indices = @transform_10, window_bounds = array<i64: 1, 3, 256>}]} {
    %c0 = arith.constant 0 : index
    %c0_0 = arith.constant 0 : index
    %0 = vector.load %arg1[%c0, %c0_0] : memref<9x256xf32, #tpu.memory_space<vmem>>, vector<9x256xf32>
    %c0_1 = arith.constant 0 : index
    %c0_2 = arith.constant 0 : index
    %c0_3 = arith.constant 0 : index
    %1 = vector.load %arg2[%c0_1, %c0_2, %c0_3] : memref<1x8x256xf32, #tpu.memory_space<vmem>>, vector<1x8x256xf32>
    %2 = vector.shape_cast %1 : vector<1x8x256xf32> to vector<8x256xf32>
    %c0_4 = arith.constant 0 : index
    %c0_5 = arith.constant 0 : index
    %3 = vector.load %arg3[%c0_4, %c0_5] : memref<8x72xf32, #tpu.memory_space<vmem>>, vector<8x72xf32>
    %4 = vector.extract_strided_slice %2 {offsets = [0, 239], sizes = [8, 17], strides = [1, 1]} : vector<8x256xf32> to vector<8x17xf32>
    %5 = vector.extract_strided_slice %2 {offsets = [0, 0], sizes = [8, 239], strides = [1, 1]} : vector<8x256xf32> to vector<8x239xf32>
    %6 = tpu.concatenate %4, %5 in 1 : vector<8x17xf32>, vector<8x239xf32> -> vector<8x256xf32>
    %7 = vector.extract_strided_slice %0 {offsets = [0, 0], sizes = [1, 256], strides = [1, 1]} : vector<9x256xf32> to vector<1x256xf32>
    %8 = vector.broadcast %7 : vector<1x256xf32> to vector<8x256xf32>
    %9 = arith.mulf %6, %8 : vector<8x256xf32>
    %10 = vector.extract_strided_slice %2 {offsets = [0, 240], sizes = [8, 16], strides = [1, 1]} : vector<8x256xf32> to vector<8x16xf32>
    %11 = vector.extract_strided_slice %2 {offsets = [0, 0], sizes = [8, 240], strides = [1, 1]} : vector<8x256xf32> to vector<8x240xf32>
    %12 = tpu.concatenate %10, %11 in 1 : vector<8x16xf32>, vector<8x240xf32> -> vector<8x256xf32>
    %13 = vector.extract_strided_slice %0 {offsets = [1, 0], sizes = [1, 256], strides = [1, 1]} : vector<9x256xf32> to vector<1x256xf32>
    %14 = vector.broadcast %13 : vector<1x256xf32> to vector<8x256xf32>
    %15 = arith.mulf %12, %14 : vector<8x256xf32>
    %16 = vector.extract_strided_slice %2 {offsets = [0, 241], sizes = [8, 15], strides = [1, 1]} : vector<8x256xf32> to vector<8x15xf32>
    %17 = vector.extract_strided_slice %2 {offsets = [0, 0], sizes = [8, 241], strides = [1, 1]} : vector<8x256xf32> to vector<8x241xf32>
    %18 = tpu.concatenate %16, %17 in 1 : vector<8x15xf32>, vector<8x241xf32> -> vector<8x256xf32>
    %19 = vector.extract_strided_slice %0 {offsets = [2, 0], sizes = [1, 256], strides = [1, 1]} : vector<9x256xf32> to vector<1x256xf32>
    %20 = vector.broadcast %19 : vector<1x256xf32> to vector<8x256xf32>
    %21 = arith.mulf %18, %20 : vector<8x256xf32>
    %22 = vector.extract_strided_slice %2 {offsets = [0, 255], sizes = [8, 1], strides = [1, 1]} : vector<8x256xf32> to vector<8x1xf32>
    %23 = vector.extract_strided_slice %2 {offsets = [0, 0], sizes = [8, 255], strides = [1, 1]} : vector<8x256xf32> to vector<8x255xf32>
    %24 = tpu.concatenate %22, %23 in 1 : vector<8x1xf32>, vector<8x255xf32> -> vector<8x256xf32>
    %25 = vector.extract_strided_slice %0 {offsets = [3, 0], sizes = [1, 256], strides = [1, 1]} : vector<9x256xf32> to vector<1x256xf32>
    %26 = vector.broadcast %25 : vector<1x256xf32> to vector<8x256xf32>
    %27 = arith.mulf %24, %26 : vector<8x256xf32>
    %28 = vector.extract_strided_slice %2 {offsets = [0, 1], sizes = [8, 255], strides = [1, 1]} : vector<8x256xf32> to vector<8x255xf32>
    %29 = vector.extract_strided_slice %2 {offsets = [0, 0], sizes = [8, 1], strides = [1, 1]} : vector<8x256xf32> to vector<8x1xf32>
    %30 = tpu.concatenate %28, %29 in 1 : vector<8x255xf32>, vector<8x1xf32> -> vector<8x256xf32>
    %31 = vector.extract_strided_slice %0 {offsets = [5, 0], sizes = [1, 256], strides = [1, 1]} : vector<9x256xf32> to vector<1x256xf32>
    %32 = vector.broadcast %31 : vector<1x256xf32> to vector<8x256xf32>
    %33 = arith.mulf %30, %32 : vector<8x256xf32>
    %34 = vector.extract_strided_slice %2 {offsets = [0, 15], sizes = [8, 241], strides = [1, 1]} : vector<8x256xf32> to vector<8x241xf32>
    %35 = vector.extract_strided_slice %2 {offsets = [0, 0], sizes = [8, 15], strides = [1, 1]} : vector<8x256xf32> to vector<8x15xf32>
    %36 = tpu.concatenate %34, %35 in 1 : vector<8x241xf32>, vector<8x15xf32> -> vector<8x256xf32>
    %37 = vector.extract_strided_slice %0 {offsets = [6, 0], sizes = [1, 256], strides = [1, 1]} : vector<9x256xf32> to vector<1x256xf32>
    %38 = vector.broadcast %37 : vector<1x256xf32> to vector<8x256xf32>
    %39 = arith.mulf %36, %38 : vector<8x256xf32>
    %40 = vector.extract_strided_slice %2 {offsets = [0, 16], sizes = [8, 240], strides = [1, 1]} : vector<8x256xf32> to vector<8x240xf32>
    %41 = vector.extract_strided_slice %2 {offsets = [0, 0], sizes = [8, 16], strides = [1, 1]} : vector<8x256xf32> to vector<8x16xf32>
    %42 = tpu.concatenate %40, %41 in 1 : vector<8x240xf32>, vector<8x16xf32> -> vector<8x256xf32>
    %43 = vector.extract_strided_slice %0 {offsets = [7, 0], sizes = [1, 256], strides = [1, 1]} : vector<9x256xf32> to vector<1x256xf32>
    %44 = vector.broadcast %43 : vector<1x256xf32> to vector<8x256xf32>
    %45 = arith.mulf %42, %44 : vector<8x256xf32>
    %46 = vector.extract_strided_slice %2 {offsets = [0, 17], sizes = [8, 239], strides = [1, 1]} : vector<8x256xf32> to vector<8x239xf32>
    %47 = vector.extract_strided_slice %2 {offsets = [0, 0], sizes = [8, 17], strides = [1, 1]} : vector<8x256xf32> to vector<8x17xf32>
    %48 = tpu.concatenate %46, %47 in 1 : vector<8x239xf32>, vector<8x17xf32> -> vector<8x256xf32>
    %49 = vector.extract_strided_slice %0 {offsets = [8, 0], sizes = [1, 256], strides = [1, 1]} : vector<9x256xf32> to vector<1x256xf32>
    %50 = vector.broadcast %49 : vector<1x256xf32> to vector<8x256xf32>
    %51 = arith.mulf %48, %50 : vector<8x256xf32>
    %52 = tpu.concatenate %9, %15, %21, %27, %2, %33, %39, %45, %51 in 0 : vector<8x256xf32>, vector<8x256xf32>, vector<8x256xf32>, vector<8x256xf32>, vector<8x256xf32>, vector<8x256xf32>, vector<8x256xf32>, vector<8x256xf32>, vector<8x256xf32> -> vector<72x256xf32>
    %cst = arith.constant dense<0.000000e+00> : vector<8x256xf32>
    %53 = tpu.matmul %3, %52, %cst {dimension_numbers = #tpu.dot_dimension_numbers<[1], [0], [0], [1], [0, 0, 1, 1], [], []>} : vector<8x72xf32>, vector<72x256xf32>, vector<8x256xf32> -> vector<8x256xf32>
    %c0_6 = arith.constant 0 : index
    %c0_7 = arith.constant 0 : index
    %54 = vector.load %arg4[%c0_6, %c0_7] : memref<8x1xf32, #tpu.memory_space<vmem>>, vector<8x1xf32>
    %55 = vector.broadcast %54 : vector<8x1xf32> to vector<8x256xf32>
    %56 = arith.mulf %53, %55 : vector<8x256xf32>
    %c0_8 = arith.constant 0 : index
    %c0_9 = arith.constant 0 : index
    %57 = vector.load %arg5[%c0_8, %c0_9] : memref<8x1xf32, #tpu.memory_space<vmem>>, vector<8x1xf32>
    %58 = vector.broadcast %57 : vector<8x1xf32> to vector<8x256xf32>
    %59 = arith.addf %56, %58 : vector<8x256xf32>
    %cst_10 = arith.constant 0.000000e+00 : f32
    %60 = vector.broadcast %cst_10 : f32 to vector<8x256xf32>
    %61 = arith.maximumf %59, %60 : vector<8x256xf32>
    %c0_11 = arith.constant 0 : index
    %c0_12 = arith.constant 0 : index
    %62 = vector.load %arg6[%c0_11, %c0_12] : memref<8x72xf32, #tpu.memory_space<vmem>>, vector<8x72xf32>
    %63 = vector.extract_strided_slice %61 {offsets = [0, 239], sizes = [8, 17], strides = [1, 1]} : vector<8x256xf32> to vector<8x17xf32>
    %64 = vector.extract_strided_slice %61 {offsets = [0, 0], sizes = [8, 239], strides = [1, 1]} : vector<8x256xf32> to vector<8x239xf32>
    %65 = tpu.concatenate %63, %64 in 1 : vector<8x17xf32>, vector<8x239xf32> -> vector<8x256xf32>
    %66 = vector.extract_strided_slice %0 {offsets = [0, 0], sizes = [1, 256], strides = [1, 1]} : vector<9x256xf32> to vector<1x256xf32>
    %67 = vector.broadcast %66 : vector<1x256xf32> to vector<8x256xf32>
    %68 = arith.mulf %65, %67 : vector<8x256xf32>
    %69 = vector.extract_strided_slice %61 {offsets = [0, 240], sizes = [8, 16], strides = [1, 1]} : vector<8x256xf32> to vector<8x16xf32>
    %70 = vector.extract_strided_slice %61 {offsets = [0, 0], sizes = [8, 240], strides = [1, 1]} : vector<8x256xf32> to vector<8x240xf32>
    %71 = tpu.concatenate %69, %70 in 1 : vector<8x16xf32>, vector<8x240xf32> -> vector<8x256xf32>
    %72 = vector.extract_strided_slice %0 {offsets = [1, 0], sizes = [1, 256], strides = [1, 1]} : vector<9x256xf32> to vector<1x256xf32>
    %73 = vector.broadcast %72 : vector<1x256xf32> to vector<8x256xf32>
    %74 = arith.mulf %71, %73 : vector<8x256xf32>
    %75 = vector.extract_strided_slice %61 {offsets = [0, 241], sizes = [8, 15], strides = [1, 1]} : vector<8x256xf32> to vector<8x15xf32>
    %76 = vector.extract_strided_slice %61 {offsets = [0, 0], sizes = [8, 241], strides = [1, 1]} : vector<8x256xf32> to vector<8x241xf32>
    %77 = tpu.concatenate %75, %76 in 1 : vector<8x15xf32>, vector<8x241xf32> -> vector<8x256xf32>
    %78 = vector.extract_strided_slice %0 {offsets = [2, 0], sizes = [1, 256], strides = [1, 1]} : vector<9x256xf32> to vector<1x256xf32>
    %79 = vector.broadcast %78 : vector<1x256xf32> to vector<8x256xf32>
    %80 = arith.mulf %77, %79 : vector<8x256xf32>
    %81 = vector.extract_strided_slice %61 {offsets = [0, 255], sizes = [8, 1], strides = [1, 1]} : vector<8x256xf32> to vector<8x1xf32>
    %82 = vector.extract_strided_slice %61 {offsets = [0, 0], sizes = [8, 255], strides = [1, 1]} : vector<8x256xf32> to vector<8x255xf32>
    %83 = tpu.concatenate %81, %82 in 1 : vector<8x1xf32>, vector<8x255xf32> -> vector<8x256xf32>
    %84 = vector.extract_strided_slice %0 {offsets = [3, 0], sizes = [1, 256], strides = [1, 1]} : vector<9x256xf32> to vector<1x256xf32>
    %85 = vector.broadcast %84 : vector<1x256xf32> to vector<8x256xf32>
    %86 = arith.mulf %83, %85 : vector<8x256xf32>
    %87 = vector.extract_strided_slice %61 {offsets = [0, 1], sizes = [8, 255], strides = [1, 1]} : vector<8x256xf32> to vector<8x255xf32>
    %88 = vector.extract_strided_slice %61 {offsets = [0, 0], sizes = [8, 1], strides = [1, 1]} : vector<8x256xf32> to vector<8x1xf32>
    %89 = tpu.concatenate %87, %88 in 1 : vector<8x255xf32>, vector<8x1xf32> -> vector<8x256xf32>
    %90 = vector.extract_strided_slice %0 {offsets = [5, 0], sizes = [1, 256], strides = [1, 1]} : vector<9x256xf32> to vector<1x256xf32>
    %91 = vector.broadcast %90 : vector<1x256xf32> to vector<8x256xf32>
    %92 = arith.mulf %89, %91 : vector<8x256xf32>
    %93 = vector.extract_strided_slice %61 {offsets = [0, 15], sizes = [8, 241], strides = [1, 1]} : vector<8x256xf32> to vector<8x241xf32>
    %94 = vector.extract_strided_slice %61 {offsets = [0, 0], sizes = [8, 15], strides = [1, 1]} : vector<8x256xf32> to vector<8x15xf32>
    %95 = tpu.concatenate %93, %94 in 1 : vector<8x241xf32>, vector<8x15xf32> -> vector<8x256xf32>
    %96 = vector.extract_strided_slice %0 {offsets = [6, 0], sizes = [1, 256], strides = [1, 1]} : vector<9x256xf32> to vector<1x256xf32>
    %97 = vector.broadcast %96 : vector<1x256xf32> to vector<8x256xf32>
    %98 = arith.mulf %95, %97 : vector<8x256xf32>
    %99 = vector.extract_strided_slice %61 {offsets = [0, 16], sizes = [8, 240], strides = [1, 1]} : vector<8x256xf32> to vector<8x240xf32>
    %100 = vector.extract_strided_slice %61 {offsets = [0, 0], sizes = [8, 16], strides = [1, 1]} : vector<8x256xf32> to vector<8x16xf32>
    %101 = tpu.concatenate %99, %100 in 1 : vector<8x240xf32>, vector<8x16xf32> -> vector<8x256xf32>
    %102 = vector.extract_strided_slice %0 {offsets = [7, 0], sizes = [1, 256], strides = [1, 1]} : vector<9x256xf32> to vector<1x256xf32>
    %103 = vector.broadcast %102 : vector<1x256xf32> to vector<8x256xf32>
    %104 = arith.mulf %101, %103 : vector<8x256xf32>
    %105 = vector.extract_strided_slice %61 {offsets = [0, 17], sizes = [8, 239], strides = [1, 1]} : vector<8x256xf32> to vector<8x239xf32>
    %106 = vector.extract_strided_slice %61 {offsets = [0, 0], sizes = [8, 17], strides = [1, 1]} : vector<8x256xf32> to vector<8x17xf32>
    %107 = tpu.concatenate %105, %106 in 1 : vector<8x239xf32>, vector<8x17xf32> -> vector<8x256xf32>
    %108 = vector.extract_strided_slice %0 {offsets = [8, 0], sizes = [1, 256], strides = [1, 1]} : vector<9x256xf32> to vector<1x256xf32>
    %109 = vector.broadcast %108 : vector<1x256xf32> to vector<8x256xf32>
    %110 = arith.mulf %107, %109 : vector<8x256xf32>
    %111 = tpu.concatenate %68, %74, %80, %86, %61, %92, %98, %104, %110 in 0 : vector<8x256xf32>, vector<8x256xf32>, vector<8x256xf32>, vector<8x256xf32>, vector<8x256xf32>, vector<8x256xf32>, vector<8x256xf32>, vector<8x256xf32>, vector<8x256xf32> -> vector<72x256xf32>
    %cst_13 = arith.constant dense<0.000000e+00> : vector<8x256xf32>
    %112 = tpu.matmul %62, %111, %cst_13 {dimension_numbers = #tpu.dot_dimension_numbers<[1], [0], [0], [1], [0, 0, 1, 1], [], []>} : vector<8x72xf32>, vector<72x256xf32>, vector<8x256xf32> -> vector<8x256xf32>
    %c0_14 = arith.constant 0 : index
    %c0_15 = arith.constant 0 : index
    %113 = vector.load %arg7[%c0_14, %c0_15] : memref<8x1xf32, #tpu.memory_space<vmem>>, vector<8x1xf32>
    %114 = vector.broadcast %113 : vector<8x1xf32> to vector<8x256xf32>
    %115 = arith.mulf %112, %114 : vector<8x256xf32>
    %c0_16 = arith.constant 0 : index
    %c0_17 = arith.constant 0 : index
    %116 = vector.load %arg8[%c0_16, %c0_17] : memref<8x1xf32, #tpu.memory_space<vmem>>, vector<8x1xf32>
    %117 = vector.broadcast %116 : vector<8x1xf32> to vector<8x256xf32>
    %118 = arith.addf %115, %117 : vector<8x256xf32>
    %cst_18 = arith.constant 0.000000e+00 : f32
    %119 = vector.broadcast %cst_18 : f32 to vector<8x256xf32>
    %120 = arith.maximumf %118, %119 : vector<8x256xf32>
    %c0_19 = arith.constant 0 : index
    %c0_20 = arith.constant 0 : index
    %121 = vector.load %arg9[%c0_19, %c0_20] : memref<3x8xf32, #tpu.memory_space<vmem>>, vector<3x8xf32>
    %cst_21 = arith.constant dense<0.000000e+00> : vector<3x256xf32>
    %122 = tpu.matmul %121, %120, %cst_21 {dimension_numbers = #tpu.dot_dimension_numbers<[1], [0], [0], [1], [0, 0, 1, 1], [], []>} : vector<3x8xf32>, vector<8x256xf32>, vector<3x256xf32> -> vector<3x256xf32>
    %c0_22 = arith.constant 0 : index
    %c0_23 = arith.constant 0 : index
    %123 = vector.load %arg10[%c0_22, %c0_23] : memref<3x1xf32, #tpu.memory_space<vmem>>, vector<3x1xf32>
    %124 = vector.broadcast %123 : vector<3x1xf32> to vector<3x256xf32>
    %125 = arith.addf %122, %124 : vector<3x256xf32>
    %c0_24 = arith.constant 0 : index
    %c0_25 = arith.constant 0 : index
    %c0_26 = arith.constant 0 : index
    %126 = vector.load %arg11[%c0_24, %c0_25, %c0_26] : memref<1x3x256xf32, #tpu.memory_space<vmem>>, vector<1x3x256xf32>
    %127 = vector.shape_cast %126 : vector<1x3x256xf32> to vector<3x256xf32>
    %128 = vector.shape_cast %125 : vector<3x256xf32> to vector<1x3x256xf32>
    tpu.vector_store %arg11[%c0_24, %c0_25, %c0_26], %128 {strides = array<i32>} : memref<1x3x256xf32, #tpu.memory_space<vmem>>, vector<1x3x256xf32>,
    return
  }
  func.func @transform_0(%arg0: i32) -> (i32, i32) {
    %c0_i32 = arith.constant 0 : i32
    %c0_i32_0 = arith.constant 0 : i32
    %c0_i32_1 = arith.constant 0 : i32
    return %c0_i32, %c0_i32_0 : i32, i32
  }
  func.func @transform_1(%arg0: i32) -> (i32, i32, i32) {
    %c0_i32 = arith.constant 0 : i32
    %c0_i32_0 = arith.constant 0 : i32
    %c0_i32_1 = arith.constant 0 : i32
    return %arg0, %c0_i32, %c0_i32_0 : i32, i32, i32
  }
  func.func @transform_2(%arg0: i32) -> (i32, i32) {
    %c0_i32 = arith.constant 0 : i32
    %c0_i32_0 = arith.constant 0 : i32
    %c0_i32_1 = arith.constant 0 : i32
    return %c0_i32, %c0_i32_0 : i32, i32
  }
  func.func @transform_3(%arg0: i32) -> (i32, i32) {
    %c0_i32 = arith.constant 0 : i32
    %c0_i32_0 = arith.constant 0 : i32
    %c0_i32_1 = arith.constant 0 : i32
    return %c0_i32, %c0_i32_0 : i32, i32
  }
  func.func @transform_4(%arg0: i32) -> (i32, i32) {
    %c0_i32 = arith.constant 0 : i32
    %c0_i32_0 = arith.constant 0 : i32
    %c0_i32_1 = arith.constant 0 : i32
    return %c0_i32, %c0_i32_0 : i32, i32
  }
  func.func @transform_5(%arg0: i32) -> (i32, i32) {
    %c0_i32 = arith.constant 0 : i32
    %c0_i32_0 = arith.constant 0 : i32
    %c0_i32_1 = arith.constant 0 : i32
    return %c0_i32, %c0_i32_0 : i32, i32
  }
  func.func @transform_6(%arg0: i32) -> (i32, i32) {
    %c0_i32 = arith.constant 0 : i32
    %c0_i32_0 = arith.constant 0 : i32
    %c0_i32_1 = arith.constant 0 : i32
    return %c0_i32, %c0_i32_0 : i32, i32
  }
  func.func @transform_7(%arg0: i32) -> (i32, i32) {
    %c0_i32 = arith.constant 0 : i32
    %c0_i32_0 = arith.constant 0 : i32
    %c0_i32_1 = arith.constant 0 : i32
    return %c0_i32, %c0_i32_0 : i32, i32
  }
  func.func @transform_8(%arg0: i32) -> (i32, i32) {
    %c0_i32 = arith.constant 0 : i32
    %c0_i32_0 = arith.constant 0 : i32
    %c0_i32_1 = arith.constant 0 : i32
    return %c0_i32, %c0_i32_0 : i32, i32
  }
  func.func @transform_9(%arg0: i32) -> (i32, i32) {
    %c0_i32 = arith.constant 0 : i32
    %c0_i32_0 = arith.constant 0 : i32
    %c0_i32_1 = arith.constant 0 : i32
    return %c0_i32, %c0_i32_0 : i32, i32
  }
  func.func @transform_10(%arg0: i32) -> (i32, i32, i32) {
    %c0_i32 = arith.constant 0 : i32
    %c0_i32_0 = arith.constant 0 : i32
    %c0_i32_1 = arith.constant 0 : i32
    return %arg0, %c0_i32, %c0_i32_0 : i32, i32, i32
  }
}

</mosaic_0001>

<llo_original>
// kernel: tpu_custom_call.1
$region0: #{tpu_custom_call.1}
  #allocation0 [shape = 'u32[]', space=smem, size = 0x4, offset = 0x4, fixed_abs, tag = 'smem constant byte address 0x4 - core index']
  #allocation1 [shape = 'u32[144,128]{1,0:T(1,128)}', space=vmem, size = 0x12000, scoped, tag = 'internal scratch']
  %s0 = inlined_call_operand.vmem [shape: f32[9,256], index: 0, kind: input, shape index: {}]
  %s1 = inlined_call_operand.hbm [shape: f32[2,8,256], index: 1, kind: input, shape index: {}]
  %s2 = inlined_call_operand.vmem [shape: f32[8,72], index: 2, kind: input, shape index: {}]
  %s3 = inlined_call_operand.vmem [shape: f32[8,1], index: 3, kind: input, shape index: {}]
  %s4 = inlined_call_operand.vmem [shape: f32[8,1], index: 4, kind: input, shape index: {}]
  %s5 = inlined_call_operand.vmem [shape: f32[8,72], index: 5, kind: input, shape index: {}]
  %s6 = inlined_call_operand.vmem [shape: f32[8,1], index: 6, kind: input, shape index: {}]
  %s7 = inlined_call_operand.vmem [shape: f32[8,1], index: 7, kind: input, shape index: {}]
  %s8 = inlined_call_operand.vmem [shape: f32[3,8], index: 8, kind: input, shape index: {}]
  %s9 = inlined_call_operand.vmem [shape: f32[3,1], index: 9, kind: input, shape index: {}]
  %s10 = inlined_call_operand.vmem [shape: f32[2,3,256], index: 10, kind: output, shape index: {}]
  %s11 = sld [smem:[#allocation0]]
  $region77: #{tpu_custom_call.1} parent=0
    _
  %s13 = ssub.s32 1, %s11
  %s14 = scalar_select 0, %s13, %s11
  $region1: #{tpu_custom_call.1} parent=0
    #allocation2 [shape = 'u8[16384]{0}', space=vmem, size = 0x4000, scoped, tag = 'input window, operand 1']
    #allocation3 [shape = 's32[2]{0}', space=sflag, size = 0x8, scoped, tag = 'scoped memory for tpu_custom_call.1']
    %15 = vsyncpa [#allocation3], 0
    %s16 = scalar_lea.sflag [#allocation3], 1
    %17 = vsyncpa %s16, 0
    loop: start=0, step=1, limit=4
    $region2: #{tpu_custom_call.1} parent=1 // loop_pre_header
      _
    $region3: #{tpu_custom_call.1} parent=1 // loop_header
      %s19 = sphi 0, %s23
      %p20 = scmp.ge.s32.totalorder %s19, 4
      %s27 = sphi 0, %s27
      %s29 = sphi 0, %s27
      %s30 = sphi 0, %s29
      %s44 = sphi 0, %s30
      %s50 = sphi 0, %s52
      %s53 = sphi 0, %s50
      %s54 = sphi 0, %s53
      %s70 = sphi 0, %s54
      %s74 = sphi 0, %s74
      %s76 = sphi 0, %s74
      %s77 = sphi 0, %s76
      %s91 = sphi 0, %s77
      %s95 = sphi 0, %s95
      %s97 = sphi 0, %s95
      %s98 = sphi 0, %s97
      %s112 = sphi 0, %s98
      %s116 = sphi 0, %s116
      %s118 = sphi 0, %s116
      %s119 = sphi 0, %s118
      %s133 = sphi 0, %s119
      %s137 = sphi 0, %s137
      %s139 = sphi 0, %s137
      %s140 = sphi 0, %s139
      %s154 = sphi 0, %s140
      %s158 = sphi 0, %s158
      %s160 = sphi 0, %s158
      %s161 = sphi 0, %s160
      %s175 = sphi 0, %s161
      %s179 = sphi 0, %s179
      %s181 = sphi 0, %s179
      %s182 = sphi 0, %s181
      %s196 = sphi 0, %s182
      %s200 = sphi 0, %s200
      %s202 = sphi 0, %s200
      %s203 = sphi 0, %s202
      %s217 = sphi 0, %s203
      %s221 = sphi 0, %s221
      %s223 = sphi 0, %s221
      %s224 = sphi 0, %s223
      %s238 = sphi 0, %s224
      %s244 = sphi 0, %s246
      %s247 = sphi 0, %s244
      %s248 = sphi 0, %s247
      %s264 = sphi 0, %s248
    $region4: #{tpu_custom_call.1} parent=1 // loop_header_branch
      %22 = sbr.rel (%p20) target = $region8
    $region5: #{tpu_custom_call.1} parent=1 // loop_body
      %s24 = ssub.s32 %s19, 1
      %s25 = ssub.s32 %s19, 2
      %s26 = sadd.s32 %s19, 1
      %s28 = sadd.s32 %s27, 1
      %p31 = scmp.eq.s32.totalorder %s19, 1
      %p32 = scmp.ne.s32.totalorder %s27, %s29
      %p33 = scmp.eq.s32.totalorder %s19, 0
      %p34 = por %p32, %p33
      %p35 = scmp.ne.s32.totalorder %s27, %s29
      %p36 = scmp.eq.s32.totalorder %s24, 1
      %p37 = por %p35, %p36
      %p38 = scmp.ne.s32.totalorder %s29, %s30
      %p39 = scmp.eq.s32.totalorder %s24, 0
      %p40 = por %p38, %p39
      %p41 = scmp.ne.s32.totalorder %s29, %s30
      %p42 = scmp.eq.s32.totalorder %s25, 1
      %p43 = por %p41, %p42
      %p45 = scmp.ne.s32.totalorder %s30, %s44
      %p46 = scmp.eq.s32.totalorder %s25, 0
      %p47 = por %p45, %p46
      %s48 = ssub.s32 %s19, %s26
      %p49 = scmp.eq.s32.totalorder %s48, 0
      %s51 = sadd.s32 %s50, 1
      %s52 = scalar_select %p49, %s50, %s51
      %p55 = pneg %p49
      %p56 = scmp.eq.s32.totalorder %s19, 1
      %p57 = por %p55, %p56
      %p58 = scmp.ne.s32.totalorder %s50, %s53
      %p59 = scmp.eq.s32.totalorder %s19, 0
      %p60 = por %p58, %p59
      %p61 = scmp.ne.s32.totalorder %s50, %s53
      %p62 = scmp.eq.s32.totalorder %s24, 1
      %p63 = por %p61, %p62
      %p64 = scmp.ne.s32.totalorder %s53, %s54
      %p65 = scmp.eq.s32.totalorder %s24, 0
      %p66 = por %p64, %p65
      %p67 = scmp.ne.s32.totalorder %s53, %s54
      %p68 = scmp.eq.s32.totalorder %s25, 1
      %p69 = por %p67, %p68
      %p71 = scmp.ne.s32.totalorder %s54, %s70
      %p72 = scmp.eq.s32.totalorder %s25, 0
      %p73 = por %p71, %p72
      %s75 = sadd.s32 %s74, 1
      %p78 = scmp.eq.s32.totalorder %s19, 1
      %p79 = scmp.ne.s32.totalorder %s74, %s76
      %p80 = scmp.eq.s32.totalorder %s19, 0
      %p81 = por %p79, %p80
      %p82 = scmp.ne.s32.totalorder %s74, %s76
      %p83 = scmp.eq.s32.totalorder %s24, 1
      %p84 = por %p82, %p83
      %p85 = scmp.ne.s32.totalorder %s76, %s77
      %p86 = scmp.eq.s32.totalorder %s24, 0
      %p87 = por %p85, %p86
      %p88 = scmp.ne.s32.totalorder %s76, %s77
      %p89 = scmp.eq.s32.totalorder %s25, 1
      %p90 = por %p88, %p89
      %p92 = scmp.ne.s32.totalorder %s77, %s91
      %p93 = scmp.eq.s32.totalorder %s25, 0
      %p94 = por %p92, %p93
      %s96 = sadd.s32 %s95, 1
      %p99 = scmp.eq.s32.totalorder %s19, 1
      %p100 = scmp.ne.s32.totalorder %s95, %s97
      %p101 = scmp.eq.s32.totalorder %s19, 0
      %p102 = por %p100, %p101
      %p103 = scmp.ne.s32.totalorder %s95, %s97
      %p104 = scmp.eq.s32.totalorder %s24, 1
      %p105 = por %p103, %p104
      %p106 = scmp.ne.s32.totalorder %s97, %s98
      %p107 = scmp.eq.s32.totalorder %s24, 0
      %p108 = por %p106, %p107
      %p109 = scmp.ne.s32.totalorder %s97, %s98
      %p110 = scmp.eq.s32.totalorder %s25, 1
      %p111 = por %p109, %p110
      %p113 = scmp.ne.s32.totalorder %s98, %s112
      %p114 = scmp.eq.s32.totalorder %s25, 0
      %p115 = por %p113, %p114
      %s117 = sadd.s32 %s116, 1
      %p120 = scmp.eq.s32.totalorder %s19, 1
      %p121 = scmp.ne.s32.totalorder %s116, %s118
      %p122 = scmp.eq.s32.totalorder %s19, 0
      %p123 = por %p121, %p122
      %p124 = scmp.ne.s32.totalorder %s116, %s118
      %p125 = scmp.eq.s32.totalorder %s24, 1
      %p126 = por %p124, %p125
      %p127 = scmp.ne.s32.totalorder %s118, %s119
      %p128 = scmp.eq.s32.totalorder %s24, 0
      %p129 = por %p127, %p128
      %p130 = scmp.ne.s32.totalorder %s118, %s119
      %p131 = scmp.eq.s32.totalorder %s25, 1
      %p132 = por %p130, %p131
      %p134 = scmp.ne.s32.totalorder %s119, %s133
      %p135 = scmp.eq.s32.totalorder %s25, 0
      %p136 = por %p134, %p135
      %s138 = sadd.s32 %s137, 1
      %p141 = scmp.eq.s32.totalorder %s19, 1
      %p142 = scmp.ne.s32.totalorder %s137, %s139
      %p143 = scmp.eq.s32.totalorder %s19, 0
      %p144 = por %p142, %p143
      %p145 = scmp.ne.s32.totalorder %s137, %s139
      %p146 = scmp.eq.s32.totalorder %s24, 1
      %p147 = por %p145, %p146
      %p148 = scmp.ne.s32.totalorder %s139, %s140
      %p149 = scmp.eq.s32.totalorder %s24, 0
      %p150 = por %p148, %p149
      %p151 = scmp.ne.s32.totalorder %s139, %s140
      %p152 = scmp.eq.s32.totalorder %s25, 1
      %p153 = por %p151, %p152
      %p155 = scmp.ne.s32.totalorder %s140, %s154
      %p156 = scmp.eq.s32.totalorder %s25, 0
      %p157 = por %p155, %p156
      %s159 = sadd.s32 %s158, 1
      %p162 = scmp.eq.s32.totalorder %s19, 1
      %p163 = scmp.ne.s32.totalorder %s158, %s160
      %p164 = scmp.eq.s32.totalorder %s19, 0
      %p165 = por %p163, %p164
      %p166 = scmp.ne.s32.totalorder %s158, %s160
      %p167 = scmp.eq.s32.totalorder %s24, 1
      %p168 = por %p166, %p167
      %p169 = scmp.ne.s32.totalorder %s160, %s161
      %p170 = scmp.eq.s32.totalorder %s24, 0
      %p171 = por %p169, %p170
      %p172 = scmp.ne.s32.totalorder %s160, %s161
      %p173 = scmp.eq.s32.totalorder %s25, 1
      %p174 = por %p172, %p173
      %p176 = scmp.ne.s32.totalorder %s161, %s175
      %p177 = scmp.eq.s32.totalorder %s25, 0
      %p178 = por %p176, %p177
      %s180 = sadd.s32 %s179, 1
      %p183 = scmp.eq.s32.totalorder %s19, 1
      %p184 = scmp.ne.s32.totalorder %s179, %s181
      %p185 = scmp.eq.s32.totalorder %s19, 0
      %p186 = por %p184, %p185
      %p187 = scmp.ne.s32.totalorder %s179, %s181
      %p188 = scmp.eq.s32.totalorder %s24, 1
      %p189 = por %p187, %p188
      %p190 = scmp.ne.s32.totalorder %s181, %s182
      %p191 = scmp.eq.s32.totalorder %s24, 0
      %p192 = por %p190, %p191
      %p193 = scmp.ne.s32.totalorder %s181, %s182
      %p194 = scmp.eq.s32.totalorder %s25, 1
      %p195 = por %p193, %p194
      %p197 = scmp.ne.s32.totalorder %s182, %s196
      %p198 = scmp.eq.s32.totalorder %s25, 0
      %p199 = por %p197, %p198
      %s201 = sadd.s32 %s200, 1
      %p204 = scmp.eq.s32.totalorder %s19, 1
      %p205 = scmp.ne.s32.totalorder %s200, %s202
      %p206 = scmp.eq.s32.totalorder %s19, 0
      %p207 = por %p205, %p206
      %p208 = scmp.ne.s32.totalorder %s200, %s202
      %p209 = scmp.eq.s32.totalorder %s24, 1
      %p210 = por %p208, %p209
      %p211 = scmp.ne.s32.totalorder %s202, %s203
      %p212 = scmp.eq.s32.totalorder %s24, 0
      %p213 = por %p211, %p212
      %p214 = scmp.ne.s32.totalorder %s202, %s203
      %p215 = scmp.eq.s32.totalorder %s25, 1
      %p216 = por %p214, %p215
      %p218 = scmp.ne.s32.totalorder %s203, %s217
      %p219 = scmp.eq.s32.totalorder %s25, 0
      %p220 = por %p218, %p219
      %s222 = sadd.s32 %s221, 1
      %p225 = scmp.eq.s32.totalorder %s19, 1
      %p226 = scmp.ne.s32.totalorder %s221, %s223
      %p227 = scmp.eq.s32.totalorder %s19, 0
      %p228 = por %p226, %p227
      %p229 = scmp.ne.s32.totalorder %s221, %s223
      %p230 = scmp.eq.s32.totalorder %s24, 1
      %p231 = por %p229, %p230
      %p232 = scmp.ne.s32.totalorder %s223, %s224
      %p233 = scmp.eq.s32.totalorder %s24, 0
      %p234 = por %p232, %p233
      %p235 = scmp.ne.s32.totalorder %s223, %s224
      %p236 = scmp.eq.s32.totalorder %s25, 1
      %p237 = por %p235, %p236
      %p239 = scmp.ne.s32.totalorder %s224, %s238
      %p240 = scmp.eq.s32.totalorder %s25, 0
      %p241 = por %p239, %p240
      %s242 = ssub.s32 %s19, %s26
      %p243 = scmp.eq.s32.totalorder %s242, 0
      %s245 = sadd.s32 %s244, 1
      %s246 = scalar_select %p243, %s244, %s245
      %p249 = pneg %p243
      %p250 = scmp.eq.s32.totalorder %s19, 1
      %p251 = por %p249, %p250
      %p252 = scmp.ne.s32.totalorder %s244, %s247
      %p253 = scmp.eq.s32.totalorder %s19, 0
      %p254 = por %p252, %p253
      %p255 = scmp.ne.s32.totalorder %s244, %s247
      %p256 = scmp.eq.s32.totalorder %s24, 1
      %p257 = por %p255, %p256
      %p258 = scmp.ne.s32.totalorder %s247, %s248
      %p259 = scmp.eq.s32.totalorder %s24, 0
      %p260 = por %p258, %p259
      %p261 = scmp.ne.s32.totalorder %s247, %s248
      %p262 = scmp.eq.s32.totalorder %s25, 1
      %p263 = por %p261, %p262
      %p265 = scmp.ne.s32.totalorder %s248, %s264
      %p266 = scmp.eq.s32.totalorder %s25, 0
      %p267 = por %p265, %p266
      %p268 = scmp.le.s32.totalorder 1, %s19
      %p269 = scmp.lt.s32.totalorder %s19, 3
      %p270 = pnand %p268, %p269
      %p271 = pneg %p270
      // Predicated region
      $region9: #{tpu_custom_call.1} parent=5 // pred_check
        _
      $region10: #{tpu_custom_call.1} parent=5 // pred_check_branch
        %273 = sbr.rel (%p270) target = $region12
      $region11: #{tpu_custom_call.1} parent=5 // pred_region
        %s274 = ssub.s32 %s19, 1
        // Predicated region
        $region13: #{tpu_custom_call.1} parent=11 // pred_check
          %p275 = pneg %p40
        $region14: #{tpu_custom_call.1} parent=11 // pred_check_branch
          %277 = sbr.rel (%p275) target = $region16
        $region15: #{tpu_custom_call.1} parent=11 // pred_region
          _
        $region16: #{tpu_custom_call.1} parent=11 // pred_fallthru
          _
        // Predicated region
        $region17: #{tpu_custom_call.1} parent=11 // pred_check
          %p278 = pneg %p87
        $region18: #{tpu_custom_call.1} parent=11 // pred_check_branch
          %280 = sbr.rel (%p278) target = $region20
        $region19: #{tpu_custom_call.1} parent=11 // pred_region
          _
        $region20: #{tpu_custom_call.1} parent=11 // pred_fallthru
          _
        // Predicated region
        $region21: #{tpu_custom_call.1} parent=11 // pred_check
          %p281 = pneg %p108
        $region22: #{tpu_custom_call.1} parent=11 // pred_check_branch
          %283 = sbr.rel (%p281) target = $region24
        $region23: #{tpu_custom_call.1} parent=11 // pred_region
          _
        $region24: #{tpu_custom_call.1} parent=11 // pred_fallthru
          _
        // Predicated region
        $region25: #{tpu_custom_call.1} parent=11 // pred_check
          %p284 = pneg %p129
        $region26: #{tpu_custom_call.1} parent=11 // pred_check_branch
          %286 = sbr.rel (%p284) target = $region28
        $region27: #{tpu_custom_call.1} parent=11 // pred_region
          _
        $region28: #{tpu_custom_call.1} parent=11 // pred_fallthru
          _
        // Predicated region
        $region29: #{tpu_custom_call.1} parent=11 // pred_check
          %p287 = pneg %p150
        $region30: #{tpu_custom_call.1} parent=11 // pred_check_branch
          %289 = sbr.rel (%p287) target = $region32
        $region31: #{tpu_custom_call.1} parent=11 // pred_region
          _
        $region32: #{tpu_custom_call.1} parent=11 // pred_fallthru
          _
        // Predicated region
        $region33: #{tpu_custom_call.1} parent=11 // pred_check
          %p290 = pneg %p171
        $region34: #{tpu_custom_call.1} parent=11 // pred_check_branch
          %292 = sbr.rel (%p290) target = $region36
        $region35: #{tpu_custom_call.1} parent=11 // pred_region
          _
        $region36: #{tpu_custom_call.1} parent=11 // pred_fallthru
          _
        // Predicated region
        $region37: #{tpu_custom_call.1} parent=11 // pred_check
          %p293 = pneg %p192
        $region38: #{tpu_custom_call.1} parent=11 // pred_check_branch
          %295 = sbr.rel (%p293) target = $region40
        $region39: #{tpu_custom_call.1} parent=11 // pred_region
          _
        $region40: #{tpu_custom_call.1} parent=11 // pred_fallthru
          _
        // Predicated region
        $region41: #{tpu_custom_call.1} parent=11 // pred_check
          %p296 = pneg %p213
        $region42: #{tpu_custom_call.1} parent=11 // pred_check_branch
          %298 = sbr.rel (%p296) target = $region44
        $region43: #{tpu_custom_call.1} parent=11 // pred_region
          _
        $region44: #{tpu_custom_call.1} parent=11 // pred_fallthru
          _
        // Predicated region
        $region45: #{tpu_custom_call.1} parent=11 // pred_check
          %p299 = pneg %p234
        $region46: #{tpu_custom_call.1} parent=11 // pred_check_branch
          %301 = sbr.rel (%p299) target = $region48
        $region47: #{tpu_custom_call.1} parent=11 // pred_region
          _
        $region48: #{tpu_custom_call.1} parent=11 // pred_fallthru
          _
      $region12: #{tpu_custom_call.1} parent=5 // pred_fallthru
        _
      %p302 = scmp.lt.s32.totalorder %s19, 2
      // Predicated region
      $region49: #{tpu_custom_call.1} parent=5 // pred_check
        %p303 = pneg %p302
      $region50: #{tpu_custom_call.1} parent=5 // pred_check_branch
        %305 = sbr.rel (%p303) target = $region52
      $region51: #{tpu_custom_call.1} parent=5 // pred_region
        // Predicated region
        $region53: #{tpu_custom_call.1} parent=51 // pred_check
          %p306 = pneg %p60
        $region54: #{tpu_custom_call.1} parent=51 // pred_check_branch
          %308 = sbr.rel (%p306) target = $region56
        $region55: #{tpu_custom_call.1} parent=51 // pred_region
          %s309 = sand.u32 %s50, 1
          %s310 = scalar_lea.sflag [#allocation3], %s309
          %s311 = sand.u32 %s50, 1
          %s312 = smul.addr %s311, 16
          %s313 = scalar_lea.vmem [#allocation2], %s312
          %s315 = ssub.s32 256, 256
          %316 = vsyncadd %s310, %s315
          %s317 = smul.addr %s19, 2
          %s318 = smul.addr %s317, 128
          %s319 = scalar_lea.hbm %s1, %s318
          %s321 = sshll.u32 %s313, 4
          %s322 = int_to_ptr.vmem [resolvable:$true] %s321
          %324 = dma.hbm_to_vmem [thread:$0]  %s319, 256, %s322, %s310
        $region56: #{tpu_custom_call.1} parent=51 // pred_fallthru
          _
      $region52: #{tpu_custom_call.1} parent=5 // pred_fallthru
        _
      %p325 = scmp.le.s32.totalorder 1, %s19
      %p326 = scmp.lt.s32.totalorder %s19, 3
      %p327 = pnand %p325, %p326
      %p328 = pneg %p327
      // Predicated region
      $region57: #{tpu_custom_call.1} parent=5 // pred_check
        _
      $region58: #{tpu_custom_call.1} parent=5 // pred_check_branch
        %330 = sbr.rel (%p327) target = $region60
      $region59: #{tpu_custom_call.1} parent=5 // pred_region
        %s331 = ssub.s32 %s19, 1
        %s332 = sand.u32 %s53, 1
        %s333 = scalar_lea.sflag [#allocation3], %s332
        %s334 = sand.u32 %s53, 1
        %s335 = smul.addr %s334, 16
        %s336 = scalar_lea.vmem [#allocation2], %s335
        // Predicated region
        $region61: #{tpu_custom_call.1} parent=59 // pred_check
          %p337 = pneg %p66
        $region62: #{tpu_custom_call.1} parent=59 // pred_check_branch
          %339 = sbr.rel (%p337) target = $region64
        $region63: #{tpu_custom_call.1} parent=59 // pred_region
          %340 = dma.done %s333, 256
        $region64: #{tpu_custom_call.1} parent=59 // pred_fallthru
          _
        %p341 = pneg %p40
        %p342 = pneg %p37
        %s343 = sand.u32 %s53, 1
        %s344 = scalar_lea.sflag [#allocation3], %s343
        %s345 = sand.u32 %s53, 1
        %s346 = smul.addr %s345, 16
        %s347 = scalar_lea.vmem [#allocation2], %s346
        %p348 = pneg %p66
        %p349 = pneg %p63
        %p350 = pneg %p87
        %p351 = pneg %p84
        %p352 = pneg %p108
        %p353 = pneg %p105
        %p354 = pneg %p129
        %p355 = pneg %p126
        %p356 = pneg %p150
        %p357 = pneg %p147
        %p358 = pneg %p171
        %p359 = pneg %p168
        %p360 = pneg %p192
        %p361 = pneg %p189
        %p362 = pneg %p213
        %p363 = pneg %p210
        %p364 = pneg %p234
        %p365 = pneg %p231
        %p366 = pneg %p260
        %p367 = pneg %p257
        %p368 = scmp.lt.s32.totalorder %s24, 1
        %s369 = scalar_select %p368, %s24, 1
        %s370 = smul.addr %s369, 2
        %s371 = smul.addr %s370, 4
        %s372 = scalar_lea.vmem %s10, %s371
        %p373 = scmp.lt.s32.totalorder %s24, 1
        %s374 = scalar_select %p373, %s24, 1
        %s375 = smul.addr %s374, 2
        %s376 = smul.addr %s375, 4
        %s377 = scalar_lea.vmem %s10, %s376
        %v378 = vld [vmem:[%s0] sm:$0xff]
        %v379 = vld [vmem:[%s0 + $0x8] sm:$0xff]
        %v380 = vld [vmem:[%s0 + $0x10] sm:$0x1]
        %v381 = vld [vmem:[%s0 + $0x18] sm:$0x1]
        %v382 = vld [vmem:[%s336] sm:$0xff]
        %v383 = vld [vmem:[%s336 + $0x8] sm:$0xff]
        %v384 = vld [vmem:[%s2] sm:$0xff]
        %386 = vrot.lane.b32.xlu0 %v383, 17
        %v387 = vpop.permute.xlu0 %386
        %390 = vrot.lane.b32.xlu0 %v382, 17
        %v391 = vpop.permute.xlu0 %390
        %vm392 = vcmask 138240
        %v393 = vsel %vm392, %v391, %v387
        %v396 = vsel %vm392, %v387, %v391
        %v397 = vlaneseq
        %v398 = vshrl.u32 %v397, 7
        %v399 = vsub.s32 0, %v398
        %v400 = vrot.slane %v378, %v399
        %v401 = vlaneseq
        %v402 = vshrl.u32 %v401, 7
        %v403 = vsub.s32 0, %v402
        %v404 = vrot.slane %v379, %v403
        %v405 = vmul.f32 %v396, %v400
        %v406 = vmul.f32 %v393, %v404
        %407 = vrot.lane.b32.xlu0 %v383, 16
        %v408 = vpop.permute.xlu0 %407
        %410 = vrot.lane.b32.xlu0 %v382, 16
        %v411 = vpop.permute.xlu0 %410
        %vm412 = vcmask 130048
        %v413 = vsel %vm412, %v411, %v408
        %v416 = vsel %vm412, %v408, %v411
        %v417 = vlaneseq
        %v418 = vshrl.u32 %v417, 7
        %v419 = vsub.s32 1, %v418
        %v420 = vrot.slane %v378, %v419
        %v421 = vlaneseq
        %v422 = vshrl.u32 %v421, 7
        %v423 = vsub.s32 1, %v422
        %v424 = vrot.slane %v379, %v423
        %v425 = vmul.f32 %v416, %v420
        %v426 = vmul.f32 %v413, %v424
        %427 = vrot.lane.b32.xlu0 %v383, 15
        %v428 = vpop.permute.xlu0 %427
        %430 = vrot.lane.b32.xlu0 %v382, 15
        %v431 = vpop.permute.xlu0 %430
        %vm432 = vcmask 121856
        %v433 = vsel %vm432, %v431, %v428
        %v436 = vsel %vm432, %v428, %v431
        %v437 = vlaneseq
        %v438 = vshrl.u32 %v437, 7
        %v439 = vsub.s32 2, %v438
        %v440 = vrot.slane %v378, %v439
        %v441 = vlaneseq
        %v442 = vshrl.u32 %v441, 7
        %v443 = vsub.s32 2, %v442
        %v444 = vrot.slane %v379, %v443
        %v445 = vmul.f32 %v436, %v440
        %v446 = vmul.f32 %v433, %v444
        %447 = vrot.lane.b32.xlu0 %v383, 1
        %v448 = vpop.permute.xlu0 %447
        %450 = vrot.lane.b32.xlu0 %v382, 1
        %v451 = vpop.permute.xlu0 %450
        %vm452 = vcmask 7168
        %v453 = vsel %vm452, %v451, %v448
        %v456 = vsel %vm452, %v448, %v451
        %v457 = vlaneseq
        %v458 = vshrl.u32 %v457, 7
        %v459 = vsub.s32 3, %v458
        %v460 = vrot.slane %v378, %v459
        %v461 = vlaneseq
        %v462 = vshrl.u32 %v461, 7
        %v463 = vsub.s32 3, %v462
        %v464 = vrot.slane %v379, %v463
        %v465 = vmul.f32 %v456, %v460
        %v466 = vmul.f32 %v453, %v464
        %467 = vrot.lane.b32.xlu0 %v382, 127
        %v468 = vpop.permute.xlu0 %467
        %469 = vrot.lane.b32.xlu0 %v383, 127
        %v470 = vpop.permute.xlu0 %469
        %vm471 = vcmask 1039360
        %v472 = vsel %vm471, %v468, %v470
        %v476 = vsel %vm471, %v470, %v468
        %v477 = vlaneseq
        %v478 = vshrl.u32 %v477, 7
        %v479 = vsub.s32 5, %v478
        %v480 = vrot.slane %v378, %v479
        %v481 = vlaneseq
        %v482 = vshrl.u32 %v481, 7
        %v483 = vsub.s32 5, %v482
        %v484 = vrot.slane %v379, %v483
        %v485 = vmul.f32 %v472, %v480
        %v486 = vmul.f32 %v476, %v484
        %487 = vrot.lane.b32.xlu0 %v382, 113
        %v488 = vpop.permute.xlu0 %487
        %489 = vrot.lane.b32.xlu0 %v383, 113
        %v490 = vpop.permute.xlu0 %489
        %vm491 = vcmask 924672
        %v492 = vsel %vm491, %v488, %v490
        %v496 = vsel %vm491, %v490, %v488
        %v497 = vlaneseq
        %v498 = vshrl.u32 %v497, 7
        %v499 = vsub.s32 6, %v498
        %v500 = vrot.slane %v378, %v499
        %v501 = vlaneseq
        %v502 = vshrl.u32 %v501, 7
        %v503 = vsub.s32 6, %v502
        %v504 = vrot.slane %v379, %v503
        %v505 = vmul.f32 %v492, %v500
        %v506 = vmul.f32 %v496, %v504
        %507 = vrot.lane.b32.xlu0 %v382, 112
        %v508 = vpop.permute.xlu0 %507
        %509 = vrot.lane.b32.xlu0 %v383, 112
        %v510 = vpop.permute.xlu0 %509
        %vm511 = vcmask 916480
        %v512 = vsel %vm511, %v508, %v510
        %v516 = vsel %vm511, %v510, %v508
        %v517 = vlaneseq
        %v518 = vshrl.u32 %v517, 7
        %v519 = vsub.s32 7, %v518
        %v520 = vrot.slane %v378, %v519
        %v521 = vlaneseq
        %v522 = vshrl.u32 %v521, 7
        %v523 = vsub.s32 7, %v522
        %v524 = vrot.slane %v379, %v523
        %v525 = vmul.f32 %v512, %v520
        %v526 = vmul.f32 %v516, %v524
        %527 = vrot.lane.b32.xlu0 %v382, 111
        %v528 = vpop.permute.xlu0 %527
        %529 = vrot.lane.b32.xlu0 %v383, 111
        %v530 = vpop.permute.xlu0 %529
        %vm531 = vcmask 908288
        %v532 = vsel %vm531, %v528, %v530
        %v536 = vsel %vm531, %v530, %v528
        %v537 = vlaneseq
        %v538 = vshrl.u32 %v537, 7
        %v539 = vsub.s32 0, %v538
        %v540 = vrot.slane %v380, %v539
        %v541 = vlaneseq
        %v542 = vshrl.u32 %v541, 7
        %v543 = vsub.s32 0, %v542
        %v544 = vrot.slane %v381, %v543
        %v545 = vmul.f32 %v532, %v540
        %v546 = vmul.f32 %v536, %v544
        %vm547 = vcmask 588800
        %v549 = vsel %vm547, %v384, 0
        %551 = vmatprep.subr.mxu0 %v406
        %552 = vmatpush1.msra.mxu0 %v405
        %553 = vmatprep.subr.mxu0 %v426
        %554 = vmatpush1.msra.mxu0 %v425
        %555 = vmatprep.subr.mxu0 %v446
        %556 = vmatpush1.msra.mxu0 %v445
        %557 = vmatprep.subr.mxu0 %v466
        %558 = vmatpush1.msra.mxu0 %v465
        %559 = vmatprep.subr.mxu0 %v383
        %560 = vmatpush1.msra.mxu0 %v382
        %561 = vmatprep.subr.mxu0 %v486
        %562 = vmatpush1.msra.mxu0 %v485
        %563 = vmatprep.subr.mxu0 %v506
        %564 = vmatpush1.msra.mxu0 %v505
        %565 = vmatprep.subr.mxu0 %v526
        %566 = vmatpush1.msra.mxu0 %v525
        %567 = vmatprep.subr.mxu0 %v546
        %568 = vmatpush1.msra.mxu0 %v545
        %569 = vmatprep.subr.mxu0 0.0
        %570 = vmatpush1.msra.mxu0 0.0
        %571 = vmatprep.subr.mxu0 0.0
        %572 = vmatpush1.msra.mxu0 0.0
        %573 = vmatprep.subr.mxu0 0.0
        %574 = vmatpush1.msra.mxu0 0.0
        %575 = vmatprep.subr.mxu0 0.0
        %576 = vmatpush1.msra.mxu0 0.0
        %577 = vmatprep.subr.mxu0 0.0
        %578 = vmatpush1.msra.mxu0 0.0
        %579 = vmatprep.subr.mxu0 0.0
        %580 = vmatpush1.msra.mxu0 0.0
        %581 = vmatprep.subr.mxu0 0.0
        %582 = vmatpush1.msra.mxu0 0.0
        %583 = vmatprep.subr.mxu0 0.0
        %584 = vmatpush1.msra.mxu0 0.0
        %585 = vmatprep.subr.mxu0 0.0
        %586 = vmatpush1.msra.mxu0 0.0
        %587 = vmatprep.subr.mxu0 0.0
        %588 = vmatpush1.msra.mxu0 0.0
        %589 = vmatprep.subr.mxu0 0.0
        %590 = vmatpush1.msra.mxu0 0.0
        %591 = vmatprep.subr.mxu0 0.0
        %592 = vmatpush1.msra.mxu0 0.0
        %593 = vmatprep.subr.mxu0 0.0
        %594 = vmatpush1.msra.mxu0 0.0
        %595 = vmatprep.subr.mxu0 0.0
        %596 = vmatpush1.msra.mxu0 0.0
        %597 = vmatprep.subr.mxu0 0.0
        %598 = vmatpush1.msra.mxu0 0.0
        %599 = vmatprep.subr.mxu0 0.0
        %600 = vmatpush1.msra.mxu0 0.0
        %601 = vmatprep.subr.mxu0 0.0
        %602 = vmatpush1.msra.mxu0 0.0
        %603 = vmatprep.subr.mxu0 0.0
        %604 = vmatpush1.msra.mxu0 0.0
        %605 = vmatprep.subr.mxu0 0.0
        %606 = vmatpush1.msra.mxu0 0.0
        %607 = vmatprep.subr.mxu0 0.0
        %608 = vmatpush1.msra.mxu0 0.0
        %609 = vmatprep.subr.mxu0 0.0
        %610 = vmatpush1.msra.mxu0 0.0
        %611 = vmatprep.subr.mxu0 0.0
        %612 = vmatpush1.msra.mxu0 0.0
        %613 = vmatprep.subr.mxu0 0.0
        %614 = vmatpush1.msra.mxu0 0.0
        %615 = vmatprep.mubr.f32.mxu0 0.0
        %616 = vmatmul.mubr.f32.gmra.mrb[0].mxu0 %v549
        %v617 = vpop.f32.mrb[0].mxu0
        %v618 = vadd.f32 0.0, %v617
        %v619 = vpop.f32.mrb[0].mxu0
        %v620 = vadd.f32 0.0, %v619
        %621 = vdwg.mxu0
        %v622 = vld [vmem:[%s3] sm:$0xff]
        %624 = vset.pattern.permute.xlu0 0
        %625 = vperm.xlu0 %624, %v622
        %v626 = vpop.permute.xlu0 %625
        %v628 = vmul.f32 %v618, %v626
        %v629 = vmul.f32 %v620, %v626
        %v630 = vld [vmem:[%s4] sm:$0xff]
        %632 = vset.pattern.permute.xlu0 0
        %633 = vperm.xlu0 %632, %v630
        %v634 = vpop.permute.xlu0 %633
        %v636 = vadd.f32 %v628, %v634
        %v637 = vadd.f32 %v629, %v634
        %v638 = vmax.f32 %v636, 0.0
        %v639 = vmax.f32 %v637, 0.0
        %v640 = vld [vmem:[%s5] sm:$0xff]
        %642 = vrot.lane.b32.xlu0 %v639, 17
        %v643 = vpop.permute.xlu0 %642
        %646 = vrot.lane.b32.xlu0 %v638, 17
        %v647 = vpop.permute.xlu0 %646
        %v648 = vsel %vm392, %v647, %v643
        %v651 = vsel %vm392, %v643, %v647
        %v652 = vmul.f32 %v651, %v400
        %v653 = vmul.f32 %v648, %v404
        %654 = vrot.lane.b32.xlu0 %v639, 16
        %v655 = vpop.permute.xlu0 %654
        %657 = vrot.lane.b32.xlu0 %v638, 16
        %v658 = vpop.permute.xlu0 %657
        %v659 = vsel %vm412, %v658, %v655
        %v662 = vsel %vm412, %v655, %v658
        %v663 = vmul.f32 %v662, %v420
        %v664 = vmul.f32 %v659, %v424
        %665 = vrot.lane.b32.xlu0 %v639, 15
        %v666 = vpop.permute.xlu0 %665
        %668 = vrot.lane.b32.xlu0 %v638, 15
        %v669 = vpop.permute.xlu0 %668
        %v670 = vsel %vm432, %v669, %v666
        %v673 = vsel %vm432, %v666, %v669
        %v674 = vmul.f32 %v673, %v440
        %v675 = vmul.f32 %v670, %v444
        %676 = vrot.lane.b32.xlu0 %v639, 1
        %v677 = vpop.permute.xlu0 %676
        %679 = vrot.lane.b32.xlu0 %v638, 1
        %v680 = vpop.permute.xlu0 %679
        %v681 = vsel %vm452, %v680, %v677
        %v684 = vsel %vm452, %v677, %v680
        %v685 = vmul.f32 %v684, %v460
        %v686 = vmul.f32 %v681, %v464
        %687 = vrot.lane.b32.xlu0 %v638, 127
        %v688 = vpop.permute.xlu0 %687
        %689 = vrot.lane.b32.xlu0 %v639, 127
        %v690 = vpop.permute.xlu0 %689
        %v691 = vsel %vm471, %v688, %v690
        %v695 = vsel %vm471, %v690, %v688
        %v696 = vmul.f32 %v691, %v480
        %v697 = vmul.f32 %v695, %v484
        %698 = vrot.lane.b32.xlu0 %v638, 113
        %v699 = vpop.permute.xlu0 %698
        %700 = vrot.lane.b32.xlu0 %v639, 113
        %v701 = vpop.permute.xlu0 %700
        %v702 = vsel %vm491, %v699, %v701
        %v706 = vsel %vm491, %v701, %v699
        %v707 = vmul.f32 %v702, %v500
        %v708 = vmul.f32 %v706, %v504
        %709 = vrot.lane.b32.xlu0 %v638, 112
        %v710 = vpop.permute.xlu0 %709
        %711 = vrot.lane.b32.xlu0 %v639, 112
        %v712 = vpop.permute.xlu0 %711
        %v713 = vsel %vm511, %v710, %v712
        %v717 = vsel %vm511, %v712, %v710
        %v718 = vmul.f32 %v713, %v520
        %v719 = vmul.f32 %v717, %v524
        %720 = vrot.lane.b32.xlu0 %v638, 111
        %v721 = vpop.permute.xlu0 %720
        %722 = vrot.lane.b32.xlu0 %v639, 111
        %v723 = vpop.permute.xlu0 %722
        %v724 = vsel %vm531, %v721, %v723
        %v728 = vsel %vm531, %v723, %v721
        %v729 = vmul.f32 %v724, %v540
        %v730 = vmul.f32 %v728, %v544
        %v732 = vsel %vm547, %v640, 0
        %734 = vmatprep.subr.mxu0 %v653
        %735 = vmatpush1.msra.mxu0 %v652
        %736 = vmatprep.subr.mxu0 %v664
        %737 = vmatpush1.msra.mxu0 %v663
        %738 = vmatprep.subr.mxu0 %v675
        %739 = vmatpush1.msra.mxu0 %v674
        %740 = vmatprep.subr.mxu0 %v686
        %741 = vmatpush1.msra.mxu0 %v685
        %742 = vmatprep.subr.mxu0 %v639
        %743 = vmatpush1.msra.mxu0 %v638
        %744 = vmatprep.subr.mxu0 %v697
        %745 = vmatpush1.msra.mxu0 %v696
        %746 = vmatprep.subr.mxu0 %v708
        %747 = vmatpush1.msra.mxu0 %v707
        %748 = vmatprep.subr.mxu0 %v719
        %749 = vmatpush1.msra.mxu0 %v718
        %750 = vmatprep.subr.mxu0 %v730
        %751 = vmatpush1.msra.mxu0 %v729
        %752 = vmatprep.subr.mxu0 0.0
        %753 = vmatpush1.msra.mxu0 0.0
        %754 = vmatprep.subr.mxu0 0.0
        %755 = vmatpush1.msra.mxu0 0.0
        %756 = vmatprep.subr.mxu0 0.0
        %757 = vmatpush1.msra.mxu0 0.0
        %758 = vmatprep.subr.mxu0 0.0
        %759 = vmatpush1.msra.mxu0 0.0
        %760 = vmatprep.subr.mxu0 0.0
        %761 = vmatpush1.msra.mxu0 0.0
        %762 = vmatprep.subr.mxu0 0.0
        %763 = vmatpush1.msra.mxu0 0.0
        %764 = vmatprep.subr.mxu0 0.0
        %765 = vmatpush1.msra.mxu0 0.0
        %766 = vmatprep.subr.mxu0 0.0
        %767 = vmatpush1.msra.mxu0 0.0
        %768 = vmatprep.subr.mxu0 0.0
        %769 = vmatpush1.msra.mxu0 0.0
        %770 = vmatprep.subr.mxu0 0.0
        %771 = vmatpush1.msra.mxu0 0.0
        %772 = vmatprep.subr.mxu0 0.0
        %773 = vmatpush1.msra.mxu0 0.0
        %774 = vmatprep.subr.mxu0 0.0
        %775 = vmatpush1.msra.mxu0 0.0
        %776 = vmatprep.subr.mxu0 0.0
        %777 = vmatpush1.msra.mxu0 0.0
        %778 = vmatprep.subr.mxu0 0.0
        %779 = vmatpush1.msra.mxu0 0.0
        %780 = vmatprep.subr.mxu0 0.0
        %781 = vmatpush1.msra.mxu0 0.0
        %782 = vmatprep.subr.mxu0 0.0
        %783 = vmatpush1.msra.mxu0 0.0
        %784 = vmatprep.subr.mxu0 0.0
        %785 = vmatpush1.msra.mxu0 0.0
        %786 = vmatprep.subr.mxu0 0.0
        %787 = vmatpush1.msra.mxu0 0.0
        %788 = vmatprep.subr.mxu0 0.0
        %789 = vmatpush1.msra.mxu0 0.0
        %790 = vmatprep.subr.mxu0 0.0
        %791 = vmatpush1.msra.mxu0 0.0
        %792 = vmatprep.subr.mxu0 0.0
        %793 = vmatpush1.msra.mxu0 0.0
        %794 = vmatprep.subr.mxu0 0.0
        %795 = vmatpush1.msra.mxu0 0.0
        %796 = vmatprep.subr.mxu0 0.0
        %797 = vmatpush1.msra.mxu0 0.0
        %798 = vmatprep.mubr.f32.mxu0 0.0
        %799 = vmatmul.mubr.f32.gmra.mrb[0].mxu0 %v732
        %v800 = vpop.f32.mrb[0].mxu0
        %v801 = vadd.f32 0.0, %v800
        %v802 = vpop.f32.mrb[0].mxu0
        %v803 = vadd.f32 0.0, %v802
        %804 = vdwg.mxu0
        %v805 = vld [vmem:[%s6] sm:$0xff]
        %807 = vset.pattern.permute.xlu0 0
        %808 = vperm.xlu0 %807, %v805
        %v809 = vpop.permute.xlu0 %808
        %v811 = vmul.f32 %v801, %v809
        %v812 = vmul.f32 %v803, %v809
        %v813 = vld [vmem:[%s7] sm:$0xff]
        %815 = vset.pattern.permute.xlu0 0
        %816 = vperm.xlu0 %815, %v813
        %v817 = vpop.permute.xlu0 %816
        %v819 = vadd.f32 %v811, %v817
        %v820 = vadd.f32 %v812, %v817
        %v821 = vmax.f32 %v819, 0.0
        %v822 = vmax.f32 %v820, 0.0
        %v823 = vld [vmem:[%s8] sm:$0x7]
        %v824 = vld [vmem:[%s9] sm:$0x7]
        %826 = vset.pattern.permute.xlu0 0
        %827 = vperm.xlu0 %826, %v824
        %v828 = vpop.permute.xlu0 %827
        %vm830 = vcmask 64512
        %v832 = vsel %vm830, %v823, 0
        %834 = vmatprep.subr.mxu0 %v822
        %835 = vmatpush1.msra.mxu0 %v821
        %836 = vmatprep.subr.mxu0 0.0
        %837 = vmatpush1.msra.mxu0 0.0
        %838 = vmatprep.subr.mxu0 0.0
        %839 = vmatpush1.msra.mxu0 0.0
        %840 = vmatprep.subr.mxu0 0.0
        %841 = vmatpush1.msra.mxu0 0.0
        %842 = vmatprep.subr.mxu0 0.0
        %843 = vmatpush1.msra.mxu0 0.0
        %844 = vmatprep.subr.mxu0 0.0
        %845 = vmatpush1.msra.mxu0 0.0
        %846 = vmatprep.subr.mxu0 0.0
        %847 = vmatpush1.msra.mxu0 0.0
        %848 = vmatprep.subr.mxu0 0.0
        %849 = vmatpush1.msra.mxu0 0.0
        %850 = vmatprep.subr.mxu0 0.0
        %851 = vmatpush1.msra.mxu0 0.0
        %852 = vmatprep.subr.mxu0 0.0
        %853 = vmatpush1.msra.mxu0 0.0
        %854 = vmatprep.subr.mxu0 0.0
        %855 = vmatpush1.msra.mxu0 0.0
        %856 = vmatprep.subr.mxu0 0.0
        %857 = vmatpush1.msra.mxu0 0.0
        %858 = vmatprep.subr.mxu0 0.0
        %859 = vmatpush1.msra.mxu0 0.0
        %860 = vmatprep.subr.mxu0 0.0
        %861 = vmatpush1.msra.mxu0 0.0
        %862 = vmatprep.subr.mxu0 0.0
        %863 = vmatpush1.msra.mxu0 0.0
        %864 = vmatprep.subr.mxu0 0.0
        %865 = vmatpush1.msra.mxu0 0.0
        %866 = vmatprep.subr.mxu0 0.0
        %867 = vmatpush1.msra.mxu0 0.0
        %868 = vmatprep.subr.mxu0 0.0
        %869 = vmatpush1.msra.mxu0 0.0
        %870 = vmatprep.subr.mxu0 0.0
        %871 = vmatpush1.msra.mxu0 0.0
        %872 = vmatprep.subr.mxu0 0.0
        %873 = vmatpush1.msra.mxu0 0.0
        %874 = vmatprep.subr.mxu0 0.0
        %875 = vmatpush1.msra.mxu0 0.0
        %876 = vmatprep.subr.mxu0 0.0
        %877 = vmatpush1.msra.mxu0 0.0
        %878 = vmatprep.subr.mxu0 0.0
        %879 = vmatpush1.msra.mxu0 0.0
        %880 = vmatprep.subr.mxu0 0.0
        %881 = vmatpush1.msra.mxu0 0.0
        %882 = vmatprep.subr.mxu0 0.0
        %883 = vmatpush1.msra.mxu0 0.0
        %884 = vmatprep.subr.mxu0 0.0
        %885 = vmatpush1.msra.mxu0 0.0
        %886 = vmatprep.subr.mxu0 0.0
        %887 = vmatpush1.msra.mxu0 0.0
        %888 = vmatprep.subr.mxu0 0.0
        %889 = vmatpush1.msra.mxu0 0.0
        %890 = vmatprep.subr.mxu0 0.0
        %891 = vmatpush1.msra.mxu0 0.0
        %892 = vmatprep.subr.mxu0 0.0
        %893 = vmatpush1.msra.mxu0 0.0
        %894 = vmatprep.subr.mxu0 0.0
        %895 = vmatpush1.msra.mxu0 0.0
        %896 = vmatprep.subr.mxu0 0.0
        %897 = vmatpush1.msra.mxu0 0.0
        %898 = vmatprep.mubr.f32.mxu0 0.0
        %899 = vmatmul.mubr.f32.gmra.mrb[0].mxu0 %v832
        %v900 = vpop.f32.mrb[0].mxu0
        %v901 = vadd.f32 %v828, %v900
        %v902 = vpop.f32.mrb[0].mxu0
        %v903 = vadd.f32 %v828, %v902
        %904 = vdwg.mxu0
        %v907 = vcombine.low %v901, %v903
        %909 = vst [vmem:[%s377] sm:$0x77] %v907
        %p910 = scmp.lt.s32.totalorder %s24, 1
        %s911 = scalar_select %p910, %s24, 1
        %s912 = smul.addr %s911, 2
        %s913 = smul.addr %s912, 4
        %s914 = scalar_lea.vmem %s10, %s913
        // Predicated region
        $region65: #{tpu_custom_call.1} parent=59 // pred_check
          %p915 = pneg %p257
        $region66: #{tpu_custom_call.1} parent=59 // pred_check_branch
          %917 = sbr.rel (%p915) target = $region68
        $region67: #{tpu_custom_call.1} parent=59 // pred_region
          _
        $region68: #{tpu_custom_call.1} parent=59 // pred_fallthru
          _
      $region60: #{tpu_custom_call.1} parent=5 // pred_fallthru
        _
      %p918 = scmp.le.s32.totalorder 2, %s19
      // Predicated region
      $region69: #{tpu_custom_call.1} parent=5 // pred_check
        %p919 = pneg %p918
      $region70: #{tpu_custom_call.1} parent=5 // pred_check_branch
        %921 = sbr.rel (%p919) target = $region72
      $region71: #{tpu_custom_call.1} parent=5 // pred_region
        %s922 = ssub.s32 %s19, 2
        // Predicated region
        $region73: #{tpu_custom_call.1} parent=71 // pred_check
          %p923 = pneg %p263
        $region74: #{tpu_custom_call.1} parent=71 // pred_check_branch
          %925 = sbr.rel (%p923) target = $region76
        $region75: #{tpu_custom_call.1} parent=71 // pred_region
          %p926 = scmp.lt.s32.totalorder %s25, 1
          %s927 = scalar_select %p926, %s25, 1
          %s928 = smul.addr %s927, 2
          %s929 = smul.addr %s928, 4
          %s930 = scalar_lea.vmem %s10, %s929
        $region76: #{tpu_custom_call.1} parent=71 // pred_fallthru
          _
      $region72: #{tpu_custom_call.1} parent=5 // pred_fallthru
        _
    $region6: #{tpu_custom_call.1} parent=1 // loop_footer
      %s23 = sadd.s32 1, %s19
    $region7: #{tpu_custom_call.1} parent=1 // loop_footer_branch
      %18 = sbr.rel target = $region3
    $region8: #{tpu_custom_call.1} parent=1 // loop_exit
      _
    %931 = vsyncpa [#allocation3], 1
    %s932 = scalar_lea.sflag [#allocation3], 1
    %933 = vsyncpa %s932, 1

</llo_original>
